<compile_context>
chip_gen: v7x
topology: tpu7x:2x2x1
jax: 0.10.0
libtpu: 0.0.40
codegen_flags: <defaults>
</compile_context>

<pallas_src>
import functools

import jax
import jax.numpy as jnp
from jax.experimental import pallas as pl
from jax.experimental.pallas import tpu as pltpu

C_IN = 512
C_MID = 256
CLASSES = 40

_HIGHEST = jax.lax.Precision.HIGHEST


def _pick_tiling(N, itemsize, n_tile):
    """Pad N to a lane-aligned length and pick the N tile size."""
    cap = 4096 if itemsize <= 2 else 2048   # ~13 MiB peak VMEM incl. double buffers
    if n_tile is None:
        n_pad = -(-N // 128) * 128          # zero-pad up to a multiple of 128
        n_tile = min(n_pad, cap)
        while n_pad % n_tile:
            n_tile -= 128
    else:
        assert n_tile % 128 == 0, "n_tile must be a multiple of 128"
        n_pad = -(-N // n_tile) * n_tile
    return n_pad, n_tile


def _cam_pool_kernel(x_ref, pooled_ref, acc_ref):
    # Train path: streaming sum of x over N (no matmul at all).
    # x_ref:      (1, 512, n_tile)  input slab (NCW)
    # pooled_ref: (1, 1, 512, 1)    per-(batch, split) partial sum_N(x)
    # acc_ref:    (512, 1) f32      running partial sum
    ni = pl.program_id(2)

    @pl.when(ni == 0)
    def _init():
        acc_ref[...] = jnp.zeros_like(acc_ref)

    # Cross-lane reduce rides the XLU slot; VPU/vst traffic is one column.
    acc_ref[...] += jnp.sum(x_ref[0].astype(jnp.float32), axis=1, keepdims=True)

    @pl.when(ni == pl.num_programs(2) - 1)
    def _finalize():
        # TODO(synk): pooled block is column-shaped (C,1); a lane-dense (1,C)
        # write would need an in-kernel (C,1)->(1,C) transpose and only fires
        # once per (batch, split), so it is left as-is for lowering robustness.
        pooled_ref[0, 0] = acc_ref[...]


def _cam_eval_kernel(compute_dtype, x_ref, w2_ref, f_ref, pooled_ref, acc_ref):
    # Eval path: emit F and accumulate its pooled sum in one pass over x.
    # x_ref:      (1, 512, n_tile)
    # w2_ref:     (256, 512)   conv2 weight (1x1 conv == plain matmul)
    # f_ref:      (1, 256, n_tile)
    # pooled_ref: (1, 1, 256, 1)
    # acc_ref:    (256, 1) f32
    ni = pl.program_id(2)

    x_t = x_ref[0]
    w2 = w2_ref[...]
    if compute_dtype is not None:      # e.g. bf16 operands on v5e f32 inputs
        x_t = x_t.astype(compute_dtype)
        w2 = w2.astype(compute_dtype)

    # 1x1 Conv1d in NCW layout: (256,512)@(512,n_tile) on the MXU, f32 acc.
    f = jnp.dot(w2, x_t, preferred_element_type=jnp.float32)
    f_ref[0] = f.astype(f_ref.dtype)

    @pl.when(ni == 0)
    def _init():
        acc_ref[...] = jnp.zeros_like(acc_ref)

    # Per-step lane reduce instead of a (256, n_tile) accumulator.
    acc_ref[...] += jnp.sum(f, axis=1, keepdims=True)

    @pl.when(ni == pl.num_programs(2) - 1)
    def _finalize():
        pooled_ref[0, 0] = acc_ref[...]


def cam_layer_forward(x, w_conv2, w_fc, b_fc, train=True, *, n_tile=None,
                      core_splits=None, compute_dtype=None, f_dtype=None):
    """x: (B,512,N). w_conv2: (256,512,1). w_fc: (classes,256). b_fc: (classes,)."""
    B, C, N = x.shape
    assert C == C_IN and N >= 1
    n_pad, n_tile = _pick_tiling(N, jnp.dtype(x.dtype).itemsize, n_tile)
    n_steps = n_pad // n_tile

    # Optional split of the N steps across a second "parallel" axis so both
    # v7x TensorCores are busy when B is small (per-split pooled partials).
    if core_splits is None:
        core_splits = 2 if (B == 1 and n_steps >= 2 and n_steps % 2 == 0) else 1
    assert n_steps % core_splits == 0
    steps_per_split = n_steps // core_splits

    x_p = x if n_pad == N else jnp.pad(x, ((0, 0), (0, 0), (0, n_pad - N)))
    inv_n = 1.0 / N   # true N, so zero-padding never biases the mean

    cparams = pltpu.CompilerParams(
        dimension_semantics=("parallel", "parallel", "arbitrary"),
        vmem_limit_bytes=28 * 1024 * 1024,
    )
    x_spec = pl.BlockSpec((1, C_IN, n_tile),
                          lambda b, s, n: (b, 0, s * steps_per_split + n))

    w_fc32 = w_fc.astype(jnp.float32)
    b_fc32 = b_fc.astype(jnp.float32)
    w2_32 = w_conv2[:, :, 0].astype(jnp.float32)

    if train:
        # Kernel only reduces x; all matmuls collapse into one tiny fused
        # (classes, 512) weight applied in plain JAX (HBM-roofline kernel).
        pooled_part = pl.pallas_call(
            _cam_pool_kernel,
            out_shape=jax.ShapeDtypeStruct((B, core_splits, C_IN, 1), jnp.float32),
            grid_spec=pltpu.PrefetchScalarGridSpec(
                num_scalar_prefetch=0,
                grid=(B, core_splits, steps_per_split),
                in_specs=[x_spec],
                out_specs=pl.BlockSpec((1, 1, C_IN, 1),
                                       lambda b, s, n: (b, s, 0, 0)),
                scratch_shapes=[pltpu.VMEM((C_IN, 1), jnp.float32)],
            ),
            compiler_params=cparams,
        )(x_p)
        x_mean = jnp.sum(pooled_part[:, :, :, 0], axis=1) * inv_n    # (B, 512) f32
        w_fused = jnp.einsum("oc,ci->oi", w_fc32, w2_32, precision=_HIGHEST)
        logits = jnp.einsum("bi,oi->bo", x_mean, w_fused, precision=_HIGHEST) + b_fc32
        return logits.astype(x.dtype)

    # Eval: emit F (NCW) and the pooled partial sums in one pass over x.
    w2 = w_conv2[:, :, 0].astype(compute_dtype if compute_dtype is not None else x.dtype)
    f_out_dtype = f_dtype if f_dtype is not None else x.dtype
    F_out, pooled_part = pl.pallas_call(
        functools.partial(_cam_eval_kernel, compute_dtype),
        out_shape=(
            jax.ShapeDtypeStruct((B, C_MID, n_pad), f_out_dtype),
            jax.ShapeDtypeStruct((B, core_splits, C_MID, 1), jnp.float32),
        ),
        grid_spec=pltpu.PrefetchScalarGridSpec(
            num_scalar_prefetch=0,
            grid=(B, core_splits, steps_per_split),
            in_specs=[
                x_spec,
                pl.BlockSpec((C_MID, C_IN), lambda b, s, n: (0, 0)),
            ],
            out_specs=[
                pl.BlockSpec((1, C_MID, n_tile),
                             lambda b, s, n: (b, 0, s * steps_per_split + n)),
                pl.BlockSpec((1, 1, C_MID, 1), lambda b, s, n: (b, s, 0, 0)),
            ],
            scratch_shapes=[pltpu.VMEM((C_MID, 1), jnp.float32)],
        ),
        compiler_params=cparams,
    )(x_p, w2)

    # Tiny lane-sparse FC head stays in plain JAX on the pooled (B,256).
    pooled = jnp.sum(pooled_part[:, :, :, 0], axis=1) * inv_n         # (B, 256) f32
    logits = jnp.einsum("bc,oc->bo", pooled, w_fc32, precision=_HIGHEST) + b_fc32
    logits = logits.astype(x.dtype)
    if n_pad != N:
        F_out = F_out[:, :, :N]
    return F_out, logits


def _reference(x, w_conv2, w_fc, b_fc):
    # Pure-JAX f32 reference for correctness checking.
    xf = x.astype(jnp.float32)
    F = jnp.einsum("oc,bcn->bon", w_conv2[:, :, 0].astype(jnp.float32), xf,
                   precision=_HIGHEST)
    pooled = jnp.mean(F, axis=2)
    logits = jnp.einsum("bc,oc->bo", pooled, w_fc.astype(jnp.float32),
                        precision=_HIGHEST) + b_fc.astype(jnp.float32)
    return F, logits


if __name__ == "__main__":
    key = jax.random.PRNGKey(0)
    k_x, k_w2, k_wfc, k_bfc = jax.random.split(key, 4)

    # Deterministic synthetic parameters (shapes match the PyTorch module).
    w_conv2 = jax.random.normal(k_w2, (C_MID, C_IN, 1), dtype=jnp.float32) * 0.02
    w_fc = jax.random.normal(k_wfc, (CLASSES, C_MID), dtype=jnp.float32) * 0.05
    b_fc = jax.random.normal(k_bfc, (CLASSES,), dtype=jnp.float32) * 0.01

    # --- Case 1: small unaligned N (B=2, N=16) -> zero-padded to one 128 tile ---
    B, N = 2, 16
    x = jax.random.normal(k_x, (B, C_IN, N), dtype=jnp.float32)
    logits_tr = jax.block_until_ready(
        cam_layer_forward(x, w_conv2, w_fc, b_fc, train=True))
    F, logits_ev = jax.block_until_ready(
        cam_layer_forward(x, w_conv2, w_fc, b_fc, train=False))
    F_ref, l_ref = _reference(x, w_conv2, w_fc, b_fc)
    assert logits_tr.shape == (B, CLASSES) and F.shape == (B, C_MID, N)
    assert jnp.allclose(logits_tr, l_ref, atol=2e-4, rtol=2e-4)
    assert jnp.allclose(logits_ev, l_ref, atol=2e-4, rtol=2e-4)
    assert jnp.allclose(F, F_ref, atol=2e-4, rtol=2e-4)

    # --- Case 2: tiled N (N=256, n_tile=128) exercises the running accumulator ---
    B2, N2 = 2, 256
    x2 = jax.random.normal(k_x, (B2, C_IN, N2), dtype=jnp.float32)
    F2, l2 = jax.block_until_ready(
        cam_layer_forward(x2, w_conv2, w_fc, b_fc, train=False, n_tile=128))
    l2_tr = jax.block_until_ready(
        cam_layer_forward(x2, w_conv2, w_fc, b_fc, train=True, n_tile=128))
    F2_ref, l2_ref = _reference(x2, w_conv2, w_fc, b_fc)
    assert jnp.allclose(l2, l2_ref, atol=2e-4, rtol=2e-4)
    assert jnp.allclose(l2_tr, l2_ref, atol=2e-4, rtol=2e-4)
    assert jnp.allclose(F2, F2_ref, atol=2e-4, rtol=2e-4)

    # --- Case 3: B=1 triggers the auto dual-core N split (per-split partials) ---
    B3, N3 = 1, 512
    x3 = jax.random.normal(k_x, (B3, C_IN, N3), dtype=jnp.float32)
    F3, l3 = jax.block_until_ready(
        cam_layer_forward(x3, w_conv2, w_fc, b_fc, train=False, n_tile=128))
    l3_tr = jax.block_until_ready(
        cam_layer_forward(x3, w_conv2, w_fc, b_fc, train=True, n_tile=128))
    F3_ref, l3_ref = _reference(x3, w_conv2, w_fc, b_fc)
    assert jnp.allclose(l3, l3_ref, atol=2e-4, rtol=2e-4)
    assert jnp.allclose(l3_tr, l3_ref, atol=2e-4, rtol=2e-4)
    assert jnp.allclose(F3, F3_ref, atol=2e-4, rtol=2e-4)

    # --- Case 4: bf16 inputs, and bf16-operand MXU + bf16 F for f32 inputs ---
    F_bf, l_bf = jax.block_until_ready(cam_layer_forward(
        x2.astype(jnp.bfloat16), w_conv2.astype(jnp.bfloat16),
        w_fc.astype(jnp.bfloat16), b_fc.astype(jnp.bfloat16),
        train=False, n_tile=128))
    assert jnp.allclose(F_bf.astype(jnp.float32), F2_ref, atol=0.1, rtol=0.1)
    assert jnp.allclose(l_bf.astype(jnp.float32), l2_ref, atol=0.1, rtol=0.1)

    F_lp, l_lp = jax.block_until_ready(cam_layer_forward(
        x2, w_conv2, w_fc, b_fc, train=False, n_tile=128,
        compute_dtype=jnp.bfloat16, f_dtype=jnp.bfloat16))
    assert jnp.allclose(F_lp.astype(jnp.float32), F2_ref, atol=0.1, rtol=0.1)
    assert jnp.allclose(l_lp.astype(jnp.float32), l2_ref, atol=0.1, rtol=0.1)

    print("KERNEL_OK")
</pallas_src>

<mosaic_0001>
module attributes {stable_mosaic.version = 11 : i64} {
  func.func @_cam_pool_kernel(%arg0: i32, %arg1: i32, %arg2: i32, %arg3: memref<1x512x128xf32, #tpu.memory_space<vmem>>, %arg4: memref<1x1x512x1xf32, #tpu.memory_space<vmem>>, %arg5: memref<512x1xf32, #tpu.memory_space<vmem>>) attributes {dimension_semantics = [#tpu.dimension_semantics<parallel>, #tpu.dimension_semantics<parallel>, #tpu.dimension_semantics<arbitrary>], iteration_bounds = array<i64: 2, 1, 1>, scalar_prefetch = 0 : i64, scratch_operands = 1 : i64, tpu.core_type = #tpu.core_type<tc>, window_params = [{transform_indices = @transform_0, window_bounds = array<i64: 1, 512, 128>}, {transform_indices = @transform_1, window_bounds = array<i64: 1, 1, 512, 1>}]} {
    %c0_i32 = arith.constant 0 : i32
    %0 = arith.cmpi eq, %arg2, %c0_i32 : i32
    %1 = arith.extui %0 : i1 to i32
    %c0_i32_0 = arith.constant 0 : i32
    %2 = arith.cmpi ne, %1, %c0_i32_0 : i32
    scf.if %2 {
      %cst_9 = arith.constant 0.000000e+00 : f32
      %13 = vector.broadcast %cst_9 : f32 to vector<512x1xf32>
      %c0_10 = arith.constant 0 : index
      %c0_11 = arith.constant 0 : index
      %14 = vector.load %arg5[%c0_10, %c0_11] : memref<512x1xf32, #tpu.memory_space<vmem>>, vector<512x1xf32>
      tpu.vector_store %arg5[%c0_10, %c0_11], %13 {strides = array<i32>} : memref<512x1xf32, #tpu.memory_space<vmem>>, vector<512x1xf32>,
    } else {
    }
    %c0 = arith.constant 0 : index
    %c0_1 = arith.constant 0 : index
    %3 = vector.load %arg5[%c0, %c0_1] : memref<512x1xf32, #tpu.memory_space<vmem>>, vector<512x1xf32>
    %c0_2 = arith.constant 0 : index
    %c0_3 = arith.constant 0 : index
    %c0_4 = arith.constant 0 : index
    %4 = vector.load %arg3[%c0_2, %c0_3, %c0_4] : memref<1x512x128xf32, #tpu.memory_space<vmem>>, vector<1x512x128xf32>
    %5 = vector.shape_cast %4 : vector<1x512x128xf32> to vector<512x128xf32>
    %cst = arith.constant dense<0.000000e+00> : vector<512xf32>
    %6 = vector.multi_reduction <add>, %5, %cst [1] : vector<512x128xf32> to vector<512xf32>
    %7 = vector.shape_cast %6 : vector<512xf32> to vector<512x1xf32>
    %8 = arith.addf %3, %7 : vector<512x1xf32>
    %c0_5 = arith.constant 0 : index
    %c0_6 = arith.constant 0 : index
    %9 = vector.load %arg5[%c0_5, %c0_6] : memref<512x1xf32, #tpu.memory_space<vmem>>, vector<512x1xf32>
    tpu.vector_store %arg5[%c0_5, %c0_6], %8 {strides = array<i32>} : memref<512x1xf32, #tpu.memory_space<vmem>>, vector<512x1xf32>,
    %c0_i32_7 = arith.constant 0 : i32
    %10 = arith.cmpi eq, %arg2, %c0_i32_7 : i32
    %11 = arith.extui %10 : i1 to i32
    %c0_i32_8 = arith.constant 0 : i32
    %12 = arith.cmpi ne, %11, %c0_i32_8 : i32
    scf.if %12 {
      %c0_9 = arith.constant 0 : index
      %c0_10 = arith.constant 0 : index
      %13 = vector.load %arg5[%c0_9, %c0_10] : memref<512x1xf32, #tpu.memory_space<vmem>>, vector<512x1xf32>
      %c0_11 = arith.constant 0 : index
      %c0_12 = arith.constant 0 : index
      %c0_13 = arith.constant 0 : index
      %c0_14 = arith.constant 0 : index
      %14 = vector.load %arg4[%c0_11, %c0_12, %c0_13, %c0_14] : memref<1x1x512x1xf32, #tpu.memory_space<vmem>>, vector<1x1x512x1xf32>
      %15 = vector.shape_cast %14 : vector<1x1x512x1xf32> to vector<512x1xf32>
      %16 = vector.shape_cast %13 : vector<512x1xf32> to vector<1x1x512x1xf32>
      tpu.vector_store %arg4[%c0_11, %c0_12, %c0_13, %c0_14], %16 {strides = array<i32>} : memref<1x1x512x1xf32, #tpu.memory_space<vmem>>, vector<1x1x512x1xf32>,
    } else {
    }
    return
  }
  func.func @transform_0(%arg0: i32, %arg1: i32, %arg2: i32) -> (i32, i32, i32) {
    %c1_i32 = arith.constant 1 : i32
    %0 = arith.muli %arg1, %c1_i32 : i32
    %1 = arith.addi %0, %arg2 : i32
    %c0_i32 = arith.constant 0 : i32
    %c0_i32_0 = arith.constant 0 : i32
    return %arg0, %c0_i32, %1 : i32, i32, i32
  }
  func.func @transform_1(%arg0: i32, %arg1: i32, %arg2: i32) -> (i32, i32, i32, i32) {
    %c0_i32 = arith.constant 0 : i32
    %c0_i32_0 = arith.constant 0 : i32
    %c0_i32_1 = arith.constant 0 : i32
    return %arg0, %arg1, %c0_i32, %c0_i32_0 : i32, i32, i32, i32
  }
}

</mosaic_0001>

<llo_original>
// kernel: tpu_custom_call.1
$region0: #{tpu_custom_call.1}
  #allocation0 [shape = 'u32[]', space=smem, size = 0x4, offset = 0x4, fixed_abs, tag = 'smem constant byte address 0x4 - core index']
  #allocation1 [shape = 'u32[144,128]{1,0:T(1,128)}', space=vmem, size = 0x12000, scoped, tag = 'internal scratch']
  #allocation2 [shape = 'f32[512,1]{1,0:T(8,128)}', space=vmem, size = 0x40000, scoped, tag = 'scratch operand']
  %s0 = inlined_call_operand.hbm [shape: f32[2,512,128], index: 0, kind: input, shape index: {}]
  %s1 = inlined_call_operand.vmem [shape: f32[2,1,512,1], index: 1, kind: output, shape index: {}]
  %s2 = sld [smem:[#allocation0]]
  $region49: #{tpu_custom_call.1} parent=0
    _
  %s4 = ssub.s32 1, %s2
  %s5 = scalar_select 0, %s4, %s2
  $region1: #{tpu_custom_call.1} parent=0
    #allocation3 [shape = 'u8[524288]{0}', space=vmem, size = 0x80000, scoped, tag = 'input window, operand 0']
    #allocation4 [shape = 's32[2]{0}', space=sflag, size = 0x8, scoped, tag = 'scoped memory for tpu_custom_call.1']
    %6 = vsyncpa [#allocation4], 0
    %s7 = scalar_lea.sflag [#allocation4], 1
    %8 = vsyncpa %s7, 0
    loop: start=0, step=1, limit=4
    $region2: #{tpu_custom_call.1} parent=1 // loop_pre_header
      _
    $region3: #{tpu_custom_call.1} parent=1 // loop_header
      %s10 = sphi 0, %s14
      %p11 = scmp.ge.s32.totalorder %s10, 4
      %s17 = sphi 0, %s36
      %s18 = sphi 0, %s32
      %s19 = sphi 0, %s28
      %s20 = sphi 0, %s17
      %s21 = sphi 0, %s18
      %s22 = sphi 0, %s19
      %s23 = sphi 0, %s20
      %s24 = sphi 0, %s21
      %s25 = sphi 0, %s22
      %s43 = sphi 0, %s45
      %s46 = sphi 0, %s43
      %s47 = sphi 0, %s46
      %s63 = sphi 0, %s47
      %s71 = sphi 0, %s73
      %s74 = sphi 0, %s71
      %s75 = sphi 0, %s74
      %s91 = sphi 0, %s75
    $region4: #{tpu_custom_call.1} parent=1 // loop_header_branch
      %13 = sbr.rel (%p11) target = $region8
    $region5: #{tpu_custom_call.1} parent=1 // loop_body
      %s15 = ssub.s32 %s10, 1
      %s16 = ssub.s32 %s10, 2
      %s26 = sadd.s32 1, %s19
      %p27 = scmp.ge.s32.totalorder %s26, 1
      %s28 = scalar_select %p27, 0, %s26
      %s29 = sadd.s32 1, %s18
      %s30 = scalar_select %p27, %s29, %s18
      %p31 = scmp.ge.s32.totalorder %s30, 1
      %s32 = scalar_select %p31, 0, %s30
      %s33 = sadd.s32 1, %s17
      %s34 = scalar_select %p31, %s33, %s17
      %p35 = scmp.ge.s32.totalorder %s34, 2
      %s36 = scalar_select %p35, 0, %s34
      %s37 = sadd.s32 %s18, %s19
      %s38 = sadd.s32 %s32, %s28
      %s39 = ssub.s32 %s17, %s36
      %s40 = ssub.s32 %s37, %s38
      %s41 = sor.u32 %s39, %s40
      %p42 = scmp.eq.s32.totalorder %s41, 0
      %s44 = sadd.s32 %s43, 1
      %s45 = scalar_select %p42, %s43, %s44
      %p48 = pneg %p42
      %p49 = scmp.eq.s32.totalorder %s10, 1
      %p50 = por %p48, %p49
      %p51 = scmp.ne.s32.totalorder %s43, %s46
      %p52 = scmp.eq.s32.totalorder %s10, 0
      %p53 = por %p51, %p52
      %p54 = scmp.ne.s32.totalorder %s43, %s46
      %p55 = scmp.eq.s32.totalorder %s15, 1
      %p56 = por %p54, %p55
      %p57 = scmp.ne.s32.totalorder %s46, %s47
      %p58 = scmp.eq.s32.totalorder %s15, 0
      %p59 = por %p57, %p58
      %p60 = scmp.ne.s32.totalorder %s46, %s47
      %p61 = scmp.eq.s32.totalorder %s16, 1
      %p62 = por %p60, %p61
      %p64 = scmp.ne.s32.totalorder %s47, %s63
      %p65 = scmp.eq.s32.totalorder %s16, 0
      %p66 = por %p64, %p65
      %s67 = ssub.s32 %s17, %s36
      %s68 = ssub.s32 %s18, %s32
      %s69 = sor.u32 %s67, %s68
      %p70 = scmp.eq.s32.totalorder %s69, 0
      %s72 = sadd.s32 %s71, 1
      %s73 = scalar_select %p70, %s71, %s72
      %p76 = pneg %p70
      %p77 = scmp.eq.s32.totalorder %s10, 1
      %p78 = por %p76, %p77
      %p79 = scmp.ne.s32.totalorder %s71, %s74
      %p80 = scmp.eq.s32.totalorder %s10, 0
      %p81 = por %p79, %p80
      %p82 = scmp.ne.s32.totalorder %s71, %s74
      %p83 = scmp.eq.s32.totalorder %s15, 1
      %p84 = por %p82, %p83
      %p85 = scmp.ne.s32.totalorder %s74, %s75
      %p86 = scmp.eq.s32.totalorder %s15, 0
      %p87 = por %p85, %p86
      %p88 = scmp.ne.s32.totalorder %s74, %s75
      %p89 = scmp.eq.s32.totalorder %s16, 1
      %p90 = por %p88, %p89
      %p92 = scmp.ne.s32.totalorder %s75, %s91
      %p93 = scmp.eq.s32.totalorder %s16, 0
      %p94 = por %p92, %p93
      %p95 = scmp.le.s32.totalorder 1, %s10
      %p96 = scmp.lt.s32.totalorder %s10, 3
      %p97 = pnand %p95, %p96
      %p98 = pneg %p97
      // Predicated region
      $region9: #{tpu_custom_call.1} parent=5 // pred_check
        _
      $region10: #{tpu_custom_call.1} parent=5 // pred_check_branch
        %100 = sbr.rel (%p97) target = $region12
      $region11: #{tpu_custom_call.1} parent=5 // pred_region
        %s101 = ssub.s32 %s10, 1
      $region12: #{tpu_custom_call.1} parent=5 // pred_fallthru
        _
      %p102 = scmp.lt.s32.totalorder %s10, 2
      // Predicated region
      $region13: #{tpu_custom_call.1} parent=5 // pred_check
        %p103 = pneg %p102
      $region14: #{tpu_custom_call.1} parent=5 // pred_check_branch
        %105 = sbr.rel (%p103) target = $region16
      $region15: #{tpu_custom_call.1} parent=5 // pred_region
        // Predicated region
        $region17: #{tpu_custom_call.1} parent=15 // pred_check
          %p106 = pneg %p53
        $region18: #{tpu_custom_call.1} parent=15 // pred_check_branch
          %108 = sbr.rel (%p106) target = $region20
        $region19: #{tpu_custom_call.1} parent=15 // pred_region
          %s109 = sand.u32 %s43, 1
          %s110 = scalar_lea.sflag [#allocation4], %s109
          %s111 = sand.u32 %s43, 1
          %s112 = smul.addr %s111, 512
          %s113 = scalar_lea.vmem [#allocation3], %s112
          %s114 = sadd.s32 %s18, %s19
          %s116 = ssub.s32 8192, 8192
          %117 = vsyncadd %s110, %s116
          %s118 = smul.addr %s17, 64
          %s119 = sadd.s32 %s114, %s118
          %s120 = smul.addr %s119, 128
          %s121 = scalar_lea.hbm %s0, %s120
          %s122 = sshll.u32 %s113, 4
          %s123 = int_to_ptr.vmem [resolvable:$true] %s122
          %128 = dma.hbm_to_vmem [thread:$0]  %s121, 8192, %s123, %s110, 128, 128, 8
        $region20: #{tpu_custom_call.1} parent=15 // pred_fallthru
          _
      $region16: #{tpu_custom_call.1} parent=5 // pred_fallthru
        _
      %p129 = scmp.le.s32.totalorder 1, %s10
      %p130 = scmp.lt.s32.totalorder %s10, 3
      %p131 = pnand %p129, %p130
      %p132 = pneg %p131
      // Predicated region
      $region21: #{tpu_custom_call.1} parent=5 // pred_check
        _
      $region22: #{tpu_custom_call.1} parent=5 // pred_check_branch
        %134 = sbr.rel (%p131) target = $region24
      $region23: #{tpu_custom_call.1} parent=5 // pred_region
        %s135 = ssub.s32 %s10, 1
        %s136 = sand.u32 %s46, 1
        %s137 = scalar_lea.sflag [#allocation4], %s136
        %s138 = sand.u32 %s46, 1
        %s139 = smul.addr %s138, 512
        %s140 = scalar_lea.vmem [#allocation3], %s139
        // Predicated region
        $region25: #{tpu_custom_call.1} parent=23 // pred_check
          %p141 = pneg %p59
        $region26: #{tpu_custom_call.1} parent=23 // pred_check_branch
          %143 = sbr.rel (%p141) target = $region28
        $region27: #{tpu_custom_call.1} parent=23 // pred_region
          %144 = dma.done %s137, 8192
        $region28: #{tpu_custom_call.1} parent=23 // pred_fallthru
          _
        %s145 = sand.u32 %s46, 1
        %s146 = scalar_lea.sflag [#allocation4], %s145
        %s147 = sand.u32 %s46, 1
        %s148 = smul.addr %s147, 512
        %s149 = scalar_lea.vmem [#allocation3], %s148
        %p150 = pneg %p59
        %p151 = pneg %p56
        %p152 = pneg %p87
        %p153 = pneg %p84
        %p154 = scmp.lt.s32.totalorder %s20, 1
        %s155 = scalar_select %p154, %s20, 1
        %p156 = scmp.lt.s32.totalorder %s21, 0
        %s157 = scalar_select %p156, %s21, 0
        %s158 = smul.addr %s157, 64
        %s159 = smul.addr %s155, 64
        %s160 = sadd.s32 %s158, %s159
        %s161 = smul.addr %s160, 8
        %s162 = scalar_lea.vmem %s1, %s161
        %s163 = sadd.s32 %s21, %s22
        %p164 = scmp.lt.s32.totalorder %s20, 1
        %s165 = scalar_select %p164, %s20, 1
        %p166 = scmp.lt.s32.totalorder %s21, 0
        %s167 = scalar_select %p166, %s21, 0
        %s168 = smul.addr %s167, 64
        %s169 = smul.addr %s165, 64
        %s170 = sadd.s32 %s168, %s169
        %s171 = smul.addr %s170, 8
        %s172 = scalar_lea.vmem %s1, %s171
        %p173 = scmp.eq.s32.totalorder %s22, 0
        // Predicated region
        $region29: #{tpu_custom_call.1} parent=23 // pred_check
          %p174 = pneg %p173
        $region30: #{tpu_custom_call.1} parent=23 // pred_check_branch
          %176 = sbr.rel (%p174) target = $region32
        $region31: #{tpu_custom_call.1} parent=23 // pred_region
          %vm177 = vcmask 7168
          %178 = vst.msk [vmem:[#allocation2] sm:$0xff] %vm177, 0.0
          %179 = vst.msk [vmem:[#allocation2 + $0x8] sm:$0xff] %vm177, 0.0
          %180 = vst.msk [vmem:[#allocation2 + $0x10] sm:$0xff] %vm177, 0.0
          %181 = vst.msk [vmem:[#allocation2 + $0x18] sm:$0xff] %vm177, 0.0
          %182 = vst.msk [vmem:[#allocation2 + $0x20] sm:$0xff] %vm177, 0.0
          %183 = vst.msk [vmem:[#allocation2 + $0x28] sm:$0xff] %vm177, 0.0
          %184 = vst.msk [vmem:[#allocation2 + $0x30] sm:$0xff] %vm177, 0.0
          %185 = vst.msk [vmem:[#allocation2 + $0x38] sm:$0xff] %vm177, 0.0
          %186 = vst.msk [vmem:[#allocation2 + $0x40] sm:$0xff] %vm177, 0.0
          %187 = vst.msk [vmem:[#allocation2 + $0x48] sm:$0xff] %vm177, 0.0
          %188 = vst.msk [vmem:[#allocation2 + $0x50] sm:$0xff] %vm177, 0.0
          %189 = vst.msk [vmem:[#allocation2 + $0x58] sm:$0xff] %vm177, 0.0
          %190 = vst.msk [vmem:[#allocation2 + $0x60] sm:$0xff] %vm177, 0.0
          %191 = vst.msk [vmem:[#allocation2 + $0x68] sm:$0xff] %vm177, 0.0
          %192 = vst.msk [vmem:[#allocation2 + $0x70] sm:$0xff] %vm177, 0.0
          %193 = vst.msk [vmem:[#allocation2 + $0x78] sm:$0xff] %vm177, 0.0
          %194 = vst.msk [vmem:[#allocation2 + $0x80] sm:$0xff] %vm177, 0.0
          %195 = vst.msk [vmem:[#allocation2 + $0x88] sm:$0xff] %vm177, 0.0
          %196 = vst.msk [vmem:[#allocation2 + $0x90] sm:$0xff] %vm177, 0.0
          %197 = vst.msk [vmem:[#allocation2 + $0x98] sm:$0xff] %vm177, 0.0
          %198 = vst.msk [vmem:[#allocation2 + $0xa0] sm:$0xff] %vm177, 0.0
          %199 = vst.msk [vmem:[#allocation2 + $0xa8] sm:$0xff] %vm177, 0.0
          %200 = vst.msk [vmem:[#allocation2 + $0xb0] sm:$0xff] %vm177, 0.0
          %201 = vst.msk [vmem:[#allocation2 + $0xb8] sm:$0xff] %vm177, 0.0
          %202 = vst.msk [vmem:[#allocation2 + $0xc0] sm:$0xff] %vm177, 0.0
          %203 = vst.msk [vmem:[#allocation2 + $0xc8] sm:$0xff] %vm177, 0.0
          %204 = vst.msk [vmem:[#allocation2 + $0xd0] sm:$0xff] %vm177, 0.0
          %205 = vst.msk [vmem:[#allocation2 + $0xd8] sm:$0xff] %vm177, 0.0
          %206 = vst.msk [vmem:[#allocation2 + $0xe0] sm:$0xff] %vm177, 0.0
          %207 = vst.msk [vmem:[#allocation2 + $0xe8] sm:$0xff] %vm177, 0.0
          %208 = vst.msk [vmem:[#allocation2 + $0xf0] sm:$0xff] %vm177, 0.0
          %209 = vst.msk [vmem:[#allocation2 + $0xf8] sm:$0xff] %vm177, 0.0
          %210 = vst.msk [vmem:[#allocation2 + $0x100] sm:$0xff] %vm177, 0.0
          %211 = vst.msk [vmem:[#allocation2 + $0x108] sm:$0xff] %vm177, 0.0
          %212 = vst.msk [vmem:[#allocation2 + $0x110] sm:$0xff] %vm177, 0.0
          %213 = vst.msk [vmem:[#allocation2 + $0x118] sm:$0xff] %vm177, 0.0
          %214 = vst.msk [vmem:[#allocation2 + $0x120] sm:$0xff] %vm177, 0.0
          %215 = vst.msk [vmem:[#allocation2 + $0x128] sm:$0xff] %vm177, 0.0
          %216 = vst.msk [vmem:[#allocation2 + $0x130] sm:$0xff] %vm177, 0.0
          %217 = vst.msk [vmem:[#allocation2 + $0x138] sm:$0xff] %vm177, 0.0
          %218 = vst.msk [vmem:[#allocation2 + $0x140] sm:$0xff] %vm177, 0.0
          %219 = vst.msk [vmem:[#allocation2 + $0x148] sm:$0xff] %vm177, 0.0
          %220 = vst.msk [vmem:[#allocation2 + $0x150] sm:$0xff] %vm177, 0.0
          %221 = vst.msk [vmem:[#allocation2 + $0x158] sm:$0xff] %vm177, 0.0
          %222 = vst.msk [vmem:[#allocation2 + $0x160] sm:$0xff] %vm177, 0.0
          %223 = vst.msk [vmem:[#allocation2 + $0x168] sm:$0xff] %vm177, 0.0
          %224 = vst.msk [vmem:[#allocation2 + $0x170] sm:$0xff] %vm177, 0.0
          %225 = vst.msk [vmem:[#allocation2 + $0x178] sm:$0xff] %vm177, 0.0
          %226 = vst.msk [vmem:[#allocation2 + $0x180] sm:$0xff] %vm177, 0.0
          %227 = vst.msk [vmem:[#allocation2 + $0x188] sm:$0xff] %vm177, 0.0
          %228 = vst.msk [vmem:[#allocation2 + $0x190] sm:$0xff] %vm177, 0.0
          %229 = vst.msk [vmem:[#allocation2 + $0x198] sm:$0xff] %vm177, 0.0
          %230 = vst.msk [vmem:[#allocation2 + $0x1a0] sm:$0xff] %vm177, 0.0
          %231 = vst.msk [vmem:[#allocation2 + $0x1a8] sm:$0xff] %vm177, 0.0
          %232 = vst.msk [vmem:[#allocation2 + $0x1b0] sm:$0xff] %vm177, 0.0
          %233 = vst.msk [vmem:[#allocation2 + $0x1b8] sm:$0xff] %vm177, 0.0
          %234 = vst.msk [vmem:[#allocation2 + $0x1c0] sm:$0xff] %vm177, 0.0
          %235 = vst.msk [vmem:[#allocation2 + $0x1c8] sm:$0xff] %vm177, 0.0
          %236 = vst.msk [vmem:[#allocation2 + $0x1d0] sm:$0xff] %vm177, 0.0
          %237 = vst.msk [vmem:[#allocation2 + $0x1d8] sm:$0xff] %vm177, 0.0
          %238 = vst.msk [vmem:[#allocation2 + $0x1e0] sm:$0xff] %vm177, 0.0
          %239 = vst.msk [vmem:[#allocation2 + $0x1e8] sm:$0xff] %vm177, 0.0
          %240 = vst.msk [vmem:[#allocation2 + $0x1f0] sm:$0xff] %vm177, 0.0
          %241 = vst.msk [vmem:[#allocation2 + $0x1f8] sm:$0xff] %vm177, 0.0
        $region32: #{tpu_custom_call.1} parent=23 // pred_fallthru
          _
        %v242 = vld [vmem:[#allocation2] sm:$0xff]
        %v243 = vld [vmem:[#allocation2 + $0x8] sm:$0xff]
        %v244 = vld [vmem:[#allocation2 + $0x10] sm:$0xff]
        %v245 = vld [vmem:[#allocation2 + $0x18] sm:$0xff]
        %v246 = vld [vmem:[#allocation2 + $0x20] sm:$0xff]
        %v247 = vld [vmem:[#allocation2 + $0x28] sm:$0xff]
        %v248 = vld [vmem:[#allocation2 + $0x30] sm:$0xff]
        %v249 = vld [vmem:[#allocation2 + $0x38] sm:$0xff]
        %v250 = vld [vmem:[#allocation2 + $0x40] sm:$0xff]
        %v251 = vld [vmem:[#allocation2 + $0x48] sm:$0xff]
        %v252 = vld [vmem:[#allocation2 + $0x50] sm:$0xff]
        %v253 = vld [vmem:[#allocation2 + $0x58] sm:$0xff]
        %v254 = vld [vmem:[#allocation2 + $0x60] sm:$0xff]
        %v255 = vld [vmem:[#allocation2 + $0x68] sm:$0xff]
        %v256 = vld [vmem:[#allocation2 + $0x70] sm:$0xff]
        %v257 = vld [vmem:[#allocation2 + $0x78] sm:$0xff]
        %v258 = vld [vmem:[#allocation2 + $0x80] sm:$0xff]
        %v259 = vld [vmem:[#allocation2 + $0x88] sm:$0xff]
        %v260 = vld [vmem:[#allocation2 + $0x90] sm:$0xff]
        %v261 = vld [vmem:[#allocation2 + $0x98] sm:$0xff]
        %v262 = vld [vmem:[#allocation2 + $0xa0] sm:$0xff]
        %v263 = vld [vmem:[#allocation2 + $0xa8] sm:$0xff]
        %v264 = vld [vmem:[#allocation2 + $0xb0] sm:$0xff]
        %v265 = vld [vmem:[#allocation2 + $0xb8] sm:$0xff]
        %v266 = vld [vmem:[#allocation2 + $0xc0] sm:$0xff]
        %v267 = vld [vmem:[#allocation2 + $0xc8] sm:$0xff]
        %v268 = vld [vmem:[#allocation2 + $0xd0] sm:$0xff]
        %v269 = vld [vmem:[#allocation2 + $0xd8] sm:$0xff]
        %v270 = vld [vmem:[#allocation2 + $0xe0] sm:$0xff]
        %v271 = vld [vmem:[#allocation2 + $0xe8] sm:$0xff]
        %v272 = vld [vmem:[#allocation2 + $0xf0] sm:$0xff]
        %v273 = vld [vmem:[#allocation2 + $0xf8] sm:$0xff]
        %v274 = vld [vmem:[#allocation2 + $0x100] sm:$0xff]
        %v275 = vld [vmem:[#allocation2 + $0x108] sm:$0xff]
        %v276 = vld [vmem:[#allocation2 + $0x110] sm:$0xff]
        %v277 = vld [vmem:[#allocation2 + $0x118] sm:$0xff]
        %v278 = vld [vmem:[#allocation2 + $0x120] sm:$0xff]
        %v279 = vld [vmem:[#allocation2 + $0x128] sm:$0xff]
        %v280 = vld [vmem:[#allocation2 + $0x130] sm:$0xff]
        %v281 = vld [vmem:[#allocation2 + $0x138] sm:$0xff]
        %v282 = vld [vmem:[#allocation2 + $0x140] sm:$0xff]
        %v283 = vld [vmem:[#allocation2 + $0x148] sm:$0xff]
        %v284 = vld [vmem:[#allocation2 + $0x150] sm:$0xff]
        %v285 = vld [vmem:[#allocation2 + $0x158] sm:$0xff]
        %v286 = vld [vmem:[#allocation2 + $0x160] sm:$0xff]
        %v287 = vld [vmem:[#allocation2 + $0x168] sm:$0xff]
        %v288 = vld [vmem:[#allocation2 + $0x170] sm:$0xff]
        %v289 = vld [vmem:[#allocation2 + $0x178] sm:$0xff]
        %v290 = vld [vmem:[#allocation2 + $0x180] sm:$0xff]
        %v291 = vld [vmem:[#allocation2 + $0x188] sm:$0xff]
        %v292 = vld [vmem:[#allocation2 + $0x190] sm:$0xff]
        %v293 = vld [vmem:[#allocation2 + $0x198] sm:$0xff]
        %v294 = vld [vmem:[#allocation2 + $0x1a0] sm:$0xff]
        %v295 = vld [vmem:[#allocation2 + $0x1a8] sm:$0xff]
        %v296 = vld [vmem:[#allocation2 + $0x1b0] sm:$0xff]
        %v297 = vld [vmem:[#allocation2 + $0x1b8] sm:$0xff]
        %v298 = vld [vmem:[#allocation2 + $0x1c0] sm:$0xff]
        %v299 = vld [vmem:[#allocation2 + $0x1c8] sm:$0xff]
        %v300 = vld [vmem:[#allocation2 + $0x1d0] sm:$0xff]
        %v301 = vld [vmem:[#allocation2 + $0x1d8] sm:$0xff]
        %v302 = vld [vmem:[#allocation2 + $0x1e0] sm:$0xff]
        %v303 = vld [vmem:[#allocation2 + $0x1e8] sm:$0xff]
        %v304 = vld [vmem:[#allocation2 + $0x1f0] sm:$0xff]
        %v305 = vld [vmem:[#allocation2 + $0x1f8] sm:$0xff]
        %v306 = vld [vmem:[%s140] sm:$0xff]
        %v307 = vld [vmem:[%s140 + $0x8] sm:$0xff]
        %v308 = vld [vmem:[%s140 + $0x10] sm:$0xff]
        %v309 = vld [vmem:[%s140 + $0x18] sm:$0xff]
        %v310 = vld [vmem:[%s140 + $0x20] sm:$0xff]
        %v311 = vld [vmem:[%s140 + $0x28] sm:$0xff]
        %v312 = vld [vmem:[%s140 + $0x30] sm:$0xff]
        %v313 = vld [vmem:[%s140 + $0x38] sm:$0xff]
        %v314 = vld [vmem:[%s140 + $0x40] sm:$0xff]
        %v315 = vld [vmem:[%s140 + $0x48] sm:$0xff]
        %v316 = vld [vmem:[%s140 + $0x50] sm:$0xff]
        %v317 = vld [vmem:[%s140 + $0x58] sm:$0xff]
        %v318 = vld [vmem:[%s140 + $0x60] sm:$0xff]
        %v319 = vld [vmem:[%s140 + $0x68] sm:$0xff]
        %v320 = vld [vmem:[%s140 + $0x70] sm:$0xff]
        %v321 = vld [vmem:[%s140 + $0x78] sm:$0xff]
        %v322 = vld [vmem:[%s140 + $0x80] sm:$0xff]
        %v323 = vld [vmem:[%s140 + $0x88] sm:$0xff]
        %v324 = vld [vmem:[%s140 + $0x90] sm:$0xff]
        %v325 = vld [vmem:[%s140 + $0x98] sm:$0xff]
        %v326 = vld [vmem:[%s140 + $0xa0] sm:$0xff]
        %v327 = vld [vmem:[%s140 + $0xa8] sm:$0xff]
        %v328 = vld [vmem:[%s140 + $0xb0] sm:$0xff]
        %v329 = vld [vmem:[%s140 + $0xb8] sm:$0xff]
        %v330 = vld [vmem:[%s140 + $0xc0] sm:$0xff]
        %v331 = vld [vmem:[%s140 + $0xc8] sm:$0xff]
        %v332 = vld [vmem:[%s140 + $0xd0] sm:$0xff]
        %v333 = vld [vmem:[%s140 + $0xd8] sm:$0xff]
        %v334 = vld [vmem:[%s140 + $0xe0] sm:$0xff]
        %v335 = vld [vmem:[%s140 + $0xe8] sm:$0xff]
        %v336 = vld [vmem:[%s140 + $0xf0] sm:$0xff]
        %v337 = vld [vmem:[%s140 + $0xf8] sm:$0xff]
        %v338 = vld [vmem:[%s140 + $0x100] sm:$0xff]
        %v339 = vld [vmem:[%s140 + $0x108] sm:$0xff]
        %v340 = vld [vmem:[%s140 + $0x110] sm:$0xff]
        %v341 = vld [vmem:[%s140 + $0x118] sm:$0xff]
        %v342 = vld [vmem:[%s140 + $0x120] sm:$0xff]
        %v343 = vld [vmem:[%s140 + $0x128] sm:$0xff]
        %v344 = vld [vmem:[%s140 + $0x130] sm:$0xff]
        %v345 = vld [vmem:[%s140 + $0x138] sm:$0xff]
        %v346 = vld [vmem:[%s140 + $0x140] sm:$0xff]
        %v347 = vld [vmem:[%s140 + $0x148] sm:$0xff]
        %v348 = vld [vmem:[%s140 + $0x150] sm:$0xff]
        %v349 = vld [vmem:[%s140 + $0x158] sm:$0xff]
        %v350 = vld [vmem:[%s140 + $0x160] sm:$0xff]
        %v351 = vld [vmem:[%s140 + $0x168] sm:$0xff]
        %v352 = vld [vmem:[%s140 + $0x170] sm:$0xff]
        %v353 = vld [vmem:[%s140 + $0x178] sm:$0xff]
        %v354 = vld [vmem:[%s140 + $0x180] sm:$0xff]
        %v355 = vld [vmem:[%s140 + $0x188] sm:$0xff]
        %v356 = vld [vmem:[%s140 + $0x190] sm:$0xff]
        %v357 = vld [vmem:[%s140 + $0x198] sm:$0xff]
        %v358 = vld [vmem:[%s140 + $0x1a0] sm:$0xff]
        %v359 = vld [vmem:[%s140 + $0x1a8] sm:$0xff]
        %v360 = vld [vmem:[%s140 + $0x1b0] sm:$0xff]
        %v361 = vld [vmem:[%s140 + $0x1b8] sm:$0xff]
        %v362 = vld [vmem:[%s140 + $0x1c0] sm:$0xff]
        %v363 = vld [vmem:[%s140 + $0x1c8] sm:$0xff]
        %v364 = vld [vmem:[%s140 + $0x1d0] sm:$0xff]
        %v365 = vld [vmem:[%s140 + $0x1d8] sm:$0xff]
        %v366 = vld [vmem:[%s140 + $0x1e0] sm:$0xff]
        %v367 = vld [vmem:[%s140 + $0x1e8] sm:$0xff]
        %v368 = vld [vmem:[%s140 + $0x1f0] sm:$0xff]
        %v369 = vld [vmem:[%s140 + $0x1f8] sm:$0xff]
        %370 = vadd.xlane.f32.xlu0 %v306
        %v371 = vpop.xlane.xlu0 %370
        %372 = vadd.xlane.f32.xlu0 %v307
        %v373 = vpop.xlane.xlu0 %372
        %374 = vadd.xlane.f32.xlu0 %v308
        %v375 = vpop.xlane.xlu0 %374
        %376 = vadd.xlane.f32.xlu0 %v309
        %v377 = vpop.xlane.xlu0 %376
        %378 = vadd.xlane.f32.xlu0 %v310
        %v379 = vpop.xlane.xlu0 %378
        %380 = vadd.xlane.f32.xlu0 %v311
        %v381 = vpop.xlane.xlu0 %380
        %382 = vadd.xlane.f32.xlu0 %v312
        %v383 = vpop.xlane.xlu0 %382
        %384 = vadd.xlane.f32.xlu0 %v313
        %v385 = vpop.xlane.xlu0 %384
        %386 = vadd.xlane.f32.xlu0 %v314
        %v387 = vpop.xlane.xlu0 %386
        %388 = vadd.xlane.f32.xlu0 %v315
        %v389 = vpop.xlane.xlu0 %388
        %390 = vadd.xlane.f32.xlu0 %v316
        %v391 = vpop.xlane.xlu0 %390
        %392 = vadd.xlane.f32.xlu0 %v317
        %v393 = vpop.xlane.xlu0 %392
        %394 = vadd.xlane.f32.xlu0 %v318
        %v395 = vpop.xlane.xlu0 %394
        %396 = vadd.xlane.f32.xlu0 %v319
        %v397 = vpop.xlane.xlu0 %396
        %398 = vadd.xlane.f32.xlu0 %v320
        %v399 = vpop.xlane.xlu0 %398
        %400 = vadd.xlane.f32.xlu0 %v321
        %v401 = vpop.xlane.xlu0 %400
        %402 = vadd.xlane.f32.xlu0 %v322
        %v403 = vpop.xlane.xlu0 %402
        %404 = vadd.xlane.f32.xlu0 %v323
        %v405 = vpop.xlane.xlu0 %404
        %406 = vadd.xlane.f32.xlu0 %v324
        %v407 = vpop.xlane.xlu0 %406
        %408 = vadd.xlane.f32.xlu0 %v325
        %v409 = vpop.xlane.xlu0 %408
        %410 = vadd.xlane.f32.xlu0 %v326
        %v411 = vpop.xlane.xlu0 %410
        %412 = vadd.xlane.f32.xlu0 %v327
        %v413 = vpop.xlane.xlu0 %412
        %414 = vadd.xlane.f32.xlu0 %v328
        %v415 = vpop.xlane.xlu0 %414
        %416 = vadd.xlane.f32.xlu0 %v329
        %v417 = vpop.xlane.xlu0 %416
        %418 = vadd.xlane.f32.xlu0 %v330
        %v419 = vpop.xlane.xlu0 %418
        %420 = vadd.xlane.f32.xlu0 %v331
        %v421 = vpop.xlane.xlu0 %420
        %422 = vadd.xlane.f32.xlu0 %v332
        %v423 = vpop.xlane.xlu0 %422
        %424 = vadd.xlane.f32.xlu0 %v333
        %v425 = vpop.xlane.xlu0 %424
        %426 = vadd.xlane.f32.xlu0 %v334
        %v427 = vpop.xlane.xlu0 %426
        %428 = vadd.xlane.f32.xlu0 %v335
        %v429 = vpop.xlane.xlu0 %428
        %430 = vadd.xlane.f32.xlu0 %v336
        %v431 = vpop.xlane.xlu0 %430
        %432 = vadd.xlane.f32.xlu0 %v337
        %v433 = vpop.xlane.xlu0 %432
        %434 = vadd.xlane.f32.xlu0 %v338
        %v435 = vpop.xlane.xlu0 %434
        %436 = vadd.xlane.f32.xlu0 %v339
        %v437 = vpop.xlane.xlu0 %436
        %438 = vadd.xlane.f32.xlu0 %v340
        %v439 = vpop.xlane.xlu0 %438
        %440 = vadd.xlane.f32.xlu0 %v341
        %v441 = vpop.xlane.xlu0 %440
        %442 = vadd.xlane.f32.xlu0 %v342
        %v443 = vpop.xlane.xlu0 %442
        %444 = vadd.xlane.f32.xlu0 %v343
        %v445 = vpop.xlane.xlu0 %444
        %446 = vadd.xlane.f32.xlu0 %v344
        %v447 = vpop.xlane.xlu0 %446
        %448 = vadd.xlane.f32.xlu0 %v345
        %v449 = vpop.xlane.xlu0 %448
        %450 = vadd.xlane.f32.xlu0 %v346
        %v451 = vpop.xlane.xlu0 %450
        %452 = vadd.xlane.f32.xlu0 %v347
        %v453 = vpop.xlane.xlu0 %452
        %454 = vadd.xlane.f32.xlu0 %v348
        %v455 = vpop.xlane.xlu0 %454
        %456 = vadd.xlane.f32.xlu0 %v349
        %v457 = vpop.xlane.xlu0 %456
        %458 = vadd.xlane.f32.xlu0 %v350
        %v459 = vpop.xlane.xlu0 %458
        %460 = vadd.xlane.f32.xlu0 %v351
        %v461 = vpop.xlane.xlu0 %460
        %462 = vadd.xlane.f32.xlu0 %v352
        %v463 = vpop.xlane.xlu0 %462
        %464 = vadd.xlane.f32.xlu0 %v353
        %v465 = vpop.xlane.xlu0 %464
        %466 = vadd.xlane.f32.xlu0 %v354
        %v467 = vpop.xlane.xlu0 %466
        %468 = vadd.xlane.f32.xlu0 %v355
        %v469 = vpop.xlane.xlu0 %468
        %470 = vadd.xlane.f32.xlu0 %v356
        %v471 = vpop.xlane.xlu0 %470
        %472 = vadd.xlane.f32.xlu0 %v357
        %v473 = vpop.xlane.xlu0 %472
        %474 = vadd.xlane.f32.xlu0 %v358
        %v475 = vpop.xlane.xlu0 %474
        %476 = vadd.xlane.f32.xlu0 %v359
        %v477 = vpop.xlane.xlu0 %476
        %478 = vadd.xlane.f32.xlu0 %v360
        %v479 = vpop.xlane.xlu0 %478
        %480 = vadd.xlane.f32.xlu0 %v361
        %v481 = vpop.xlane.xlu0 %480
        %482 = vadd.xlane.f32.xlu0 %v362
        %v483 = vpop.xlane.xlu0 %482
        %484 = vadd.xlane.f32.xlu0 %v363
        %v485 = vpop.xlane.xlu0 %484
        %486 = vadd.xlane.f32.xlu0 %v364
        %v487 = vpop.xlane.xlu0 %486
        %488 = vadd.xlane.f32.xlu0 %v365
        %v489 = vpop.xlane.xlu0 %488
        %490 = vadd.xlane.f32.xlu0 %v366
        %v491 = vpop.xlane.xlu0 %490
        %492 = vadd.xlane.f32.xlu0 %v367
        %v493 = vpop.xlane.xlu0 %492
        %494 = vadd.xlane.f32.xlu0 %v368
        %v495 = vpop.xlane.xlu0 %494
        %496 = vadd.xlane.f32.xlu0 %v369
        %v497 = vpop.xlane.xlu0 %496
        %v498 = vadd.f32 %v242, %v371
        %v499 = vadd.f32 %v243, %v373
        %v500 = vadd.f32 %v244, %v375
        %v501 = vadd.f32 %v245, %v377
        %v502 = vadd.f32 %v246, %v379
        %v503 = vadd.f32 %v247, %v381
        %v504 = vadd.f32 %v248, %v383
        %v505 = vadd.f32 %v249, %v385
        %v506 = vadd.f32 %v250, %v387
        %v507 = vadd.f32 %v251, %v389
        %v508 = vadd.f32 %v252, %v391
        %v509 = vadd.f32 %v253, %v393
        %v510 = vadd.f32 %v254, %v395
        %v511 = vadd.f32 %v255, %v397
        %v512 = vadd.f32 %v256, %v399
        %v513 = vadd.f32 %v257, %v401
        %v514 = vadd.f32 %v258, %v403
        %v515 = vadd.f32 %v259, %v405
        %v516 = vadd.f32 %v260, %v407
        %v517 = vadd.f32 %v261, %v409
        %v518 = vadd.f32 %v262, %v411
        %v519 = vadd.f32 %v263, %v413
        %v520 = vadd.f32 %v264, %v415
        %v521 = vadd.f32 %v265, %v417
        %v522 = vadd.f32 %v266, %v419
        %v523 = vadd.f32 %v267, %v421
        %v524 = vadd.f32 %v268, %v423
        %v525 = vadd.f32 %v269, %v425
        %v526 = vadd.f32 %v270, %v427
        %v527 = vadd.f32 %v271, %v429
        %v528 = vadd.f32 %v272, %v431
        %v529 = vadd.f32 %v273, %v433
        %v530 = vadd.f32 %v274, %v435
        %v531 = vadd.f32 %v275, %v437
        %v532 = vadd.f32 %v276, %v439
        %v533 = vadd.f32 %v277, %v441
        %v534 = vadd.f32 %v278, %v443
        %v535 = vadd.f32 %v279, %v445
        %v536 = vadd.f32 %v280, %v447
        %v537 = vadd.f32 %v281, %v449
        %v538 = vadd.f32 %v282, %v451
        %v539 = vadd.f32 %v283, %v453
        %v540 = vadd.f32 %v284, %v455
        %v541 = vadd.f32 %v285, %v457
        %v542 = vadd.f32 %v286, %v459
        %v543 = vadd.f32 %v287, %v461
        %v544 = vadd.f32 %v288, %v463
        %v545 = vadd.f32 %v289, %v465
        %v546 = vadd.f32 %v290, %v467
        %v547 = vadd.f32 %v291, %v469
        %v548 = vadd.f32 %v292, %v471
        %v549 = vadd.f32 %v293, %v473
        %v550 = vadd.f32 %v294, %v475
        %v551 = vadd.f32 %v295, %v477
        %v552 = vadd.f32 %v296, %v479
        %v553 = vadd.f32 %v297, %v481
        %v554 = vadd.f32 %v298, %v483
        %v555 = vadd.f32 %v299, %v485
        %v556 = vadd.f32 %v300, %v487
        %v557 = vadd.f32 %v301, %v489
        %v558 = vadd.f32 %v302, %v491
        %v559 = vadd.f32 %v303, %v493
        %v560 = vadd.f32 %v304, %v495
        %v561 = vadd.f32 %v305, %v497
        %vm562 = vcmask 7168
        %563 = vst.msk [vmem:[#allocation2] sm:$0xff] %vm562, %v498
        %564 = vst.msk [vmem:[#allocation2 + $0x8] sm:$0xff] %vm562, %v499
        %565 = vst.msk [vmem:[#allocation2 + $0x10] sm:$0xff] %vm562, %v500
        %566 = vst.msk [vmem:[#allocation2 + $0x18] sm:$0xff] %vm562, %v501
        %567 = vst.msk [vmem:[#allocation2 + $0x20] sm:$0xff] %vm562, %v502
        %568 = vst.msk [vmem:[#allocation2 + $0x28] sm:$0xff] %vm562, %v503
        %569 = vst.msk [vmem:[#allocation2 + $0x30] sm:$0xff] %vm562, %v504
        %570 = vst.msk [vmem:[#allocation2 + $0x38] sm:$0xff] %vm562, %v505
        %571 = vst.msk [vmem:[#allocation2 + $0x40] sm:$0xff] %vm562, %v506
        %572 = vst.msk [vmem:[#allocation2 + $0x48] sm:$0xff] %vm562, %v507
        %573 = vst.msk [vmem:[#allocation2 + $0x50] sm:$0xff] %vm562, %v508
        %574 = vst.msk [vmem:[#allocation2 + $0x58] sm:$0xff] %vm562, %v509
        %575 = vst.msk [vmem:[#allocation2 + $0x60] sm:$0xff] %vm562, %v510
        %576 = vst.msk [vmem:[#allocation2 + $0x68] sm:$0xff] %vm562, %v511
        %577 = vst.msk [vmem:[#allocation2 + $0x70] sm:$0xff] %vm562, %v512
        %578 = vst.msk [vmem:[#allocation2 + $0x78] sm:$0xff] %vm562, %v513
        %579 = vst.msk [vmem:[#allocation2 + $0x80] sm:$0xff] %vm562, %v514
        %580 = vst.msk [vmem:[#allocation2 + $0x88] sm:$0xff] %vm562, %v515
        %581 = vst.msk [vmem:[#allocation2 + $0x90] sm:$0xff] %vm562, %v516
        %582 = vst.msk [vmem:[#allocation2 + $0x98] sm:$0xff] %vm562, %v517
        %583 = vst.msk [vmem:[#allocation2 + $0xa0] sm:$0xff] %vm562, %v518
        %584 = vst.msk [vmem:[#allocation2 + $0xa8] sm:$0xff] %vm562, %v519
        %585 = vst.msk [vmem:[#allocation2 + $0xb0] sm:$0xff] %vm562, %v520
        %586 = vst.msk [vmem:[#allocation2 + $0xb8] sm:$0xff] %vm562, %v521
        %587 = vst.msk [vmem:[#allocation2 + $0xc0] sm:$0xff] %vm562, %v522
        %588 = vst.msk [vmem:[#allocation2 + $0xc8] sm:$0xff] %vm562, %v523
        %589 = vst.msk [vmem:[#allocation2 + $0xd0] sm:$0xff] %vm562, %v524
        %590 = vst.msk [vmem:[#allocation2 + $0xd8] sm:$0xff] %vm562, %v525
        %591 = vst.msk [vmem:[#allocation2 + $0xe0] sm:$0xff] %vm562, %v526
        %592 = vst.msk [vmem:[#allocation2 + $0xe8] sm:$0xff] %vm562, %v527
        %593 = vst.msk [vmem:[#allocation2 + $0xf0] sm:$0xff] %vm562, %v528
        %594 = vst.msk [vmem:[#allocation2 + $0xf8] sm:$0xff] %vm562, %v529
        %595 = vst.msk [vmem:[#allocation2 + $0x100] sm:$0xff] %vm562, %v530
        %596 = vst.msk [vmem:[#allocation2 + $0x108] sm:$0xff] %vm562, %v531
        %597 = vst.msk [vmem:[#allocation2 + $0x110] sm:$0xff] %vm562, %v532
        %598 = vst.msk [vmem:[#allocation2 + $0x118] sm:$0xff] %vm562, %v533
        %599 = vst.msk [vmem:[#allocation2 + $0x120] sm:$0xff] %vm562, %v534
        %600 = vst.msk [vmem:[#allocation2 + $0x128] sm:$0xff] %vm562, %v535
        %601 = vst.msk [vmem:[#allocation2 + $0x130] sm:$0xff] %vm562, %v536
        %602 = vst.msk [vmem:[#allocation2 + $0x138] sm:$0xff] %vm562, %v537
        %603 = vst.msk [vmem:[#allocation2 + $0x140] sm:$0xff] %vm562, %v538
        %604 = vst.msk [vmem:[#allocation2 + $0x148] sm:$0xff] %vm562, %v539
        %605 = vst.msk [vmem:[#allocation2 + $0x150] sm:$0xff] %vm562, %v540
        %606 = vst.msk [vmem:[#allocation2 + $0x158] sm:$0xff] %vm562, %v541
        %607 = vst.msk [vmem:[#allocation2 + $0x160] sm:$0xff] %vm562, %v542
        %608 = vst.msk [vmem:[#allocation2 + $0x168] sm:$0xff] %vm562, %v543
        %609 = vst.msk [vmem:[#allocation2 + $0x170] sm:$0xff] %vm562, %v544
        %610 = vst.msk [vmem:[#allocation2 + $0x178] sm:$0xff] %vm562, %v545
        %611 = vst.msk [vmem:[#allocation2 + $0x180] sm:$0xff] %vm562, %v546
        %612 = vst.msk [vmem:[#allocation2 + $0x188] sm:$0xff] %vm562, %v547
        %613 = vst.msk [vmem:[#allocation2 + $0x190] sm:$0xff] %vm562, %v548
        %614 = vst.msk [vmem:[#allocation2 + $0x198] sm:$0xff] %vm562, %v549
        %615 = vst.msk [vmem:[#allocation2 + $0x1a0] sm:$0xff] %vm562, %v550
        %616 = vst.msk [vmem:[#allocation2 + $0x1a8] sm:$0xff] %vm562, %v551
        %617 = vst.msk [vmem:[#allocation2 + $0x1b0] sm:$0xff] %vm562, %v552
        %618 = vst.msk [vmem:[#allocation2 + $0x1b8] sm:$0xff] %vm562, %v553
        %619 = vst.msk [vmem:[#allocation2 + $0x1c0] sm:$0xff] %vm562, %v554
        %620 = vst.msk [vmem:[#allocation2 + $0x1c8] sm:$0xff] %vm562, %v555
        %621 = vst.msk [vmem:[#allocation2 + $0x1d0] sm:$0xff] %vm562, %v556
        %622 = vst.msk [vmem:[#allocation2 + $0x1d8] sm:$0xff] %vm562, %v557
        %623 = vst.msk [vmem:[#allocation2 + $0x1e0] sm:$0xff] %vm562, %v558
        %624 = vst.msk [vmem:[#allocation2 + $0x1e8] sm:$0xff] %vm562, %v559
        %625 = vst.msk [vmem:[#allocation2 + $0x1f0] sm:$0xff] %vm562, %v560
        %626 = vst.msk [vmem:[#allocation2 + $0x1f8] sm:$0xff] %vm562, %v561
        // Predicated region
        $region33: #{tpu_custom_call.1} parent=23 // pred_check
          %p627 = pneg %p173
        $region34: #{tpu_custom_call.1} parent=23 // pred_check_branch
          %629 = sbr.rel (%p627) target = $region36
        $region35: #{tpu_custom_call.1} parent=23 // pred_region
          %v630 = vld [vmem:[#allocation2] sm:$0xff]
          %v631 = vld [vmem:[#allocation2 + $0x8] sm:$0xff]
          %v632 = vld [vmem:[#allocation2 + $0x10] sm:$0xff]
          %v633 = vld [vmem:[#allocation2 + $0x18] sm:$0xff]
          %v634 = vld [vmem:[#allocation2 + $0x20] sm:$0xff]
          %v635 = vld [vmem:[#allocation2 + $0x28] sm:$0xff]
          %v636 = vld [vmem:[#allocation2 + $0x30] sm:$0xff]
          %v637 = vld [vmem:[#allocation2 + $0x38] sm:$0xff]
          %v638 = vld [vmem:[#allocation2 + $0x40] sm:$0xff]
          %v639 = vld [vmem:[#allocation2 + $0x48] sm:$0xff]
          %v640 = vld [vmem:[#allocation2 + $0x50] sm:$0xff]
          %v641 = vld [vmem:[#allocation2 + $0x58] sm:$0xff]
          %v642 = vld [vmem:[#allocation2 + $0x60] sm:$0xff]
          %v643 = vld [vmem:[#allocation2 + $0x68] sm:$0xff]
          %v644 = vld [vmem:[#allocation2 + $0x70] sm:$0xff]
          %v645 = vld [vmem:[#allocation2 + $0x78] sm:$0xff]
          %v646 = vld [vmem:[#allocation2 + $0x80] sm:$0xff]
          %v647 = vld [vmem:[#allocation2 + $0x88] sm:$0xff]
          %v648 = vld [vmem:[#allocation2 + $0x90] sm:$0xff]
          %v649 = vld [vmem:[#allocation2 + $0x98] sm:$0xff]
          %v650 = vld [vmem:[#allocation2 + $0xa0] sm:$0xff]
          %v651 = vld [vmem:[#allocation2 + $0xa8] sm:$0xff]
          %v652 = vld [vmem:[#allocation2 + $0xb0] sm:$0xff]
          %v653 = vld [vmem:[#allocation2 + $0xb8] sm:$0xff]
          %v654 = vld [vmem:[#allocation2 + $0xc0] sm:$0xff]
          %v655 = vld [vmem:[#allocation2 + $0xc8] sm:$0xff]
          %v656 = vld [vmem:[#allocation2 + $0xd0] sm:$0xff]
          %v657 = vld [vmem:[#allocation2 + $0xd8] sm:$0xff]
          %v658 = vld [vmem:[#allocation2 + $0xe0] sm:$0xff]
          %v659 = vld [vmem:[#allocation2 + $0xe8] sm:$0xff]
          %v660 = vld [vmem:[#allocation2 + $0xf0] sm:$0xff]
          %v661 = vld [vmem:[#allocation2 + $0xf8] sm:$0xff]
          %v662 = vld [vmem:[#allocation2 + $0x100] sm:$0xff]
          %v663 = vld [vmem:[#allocation2 + $0x108] sm:$0xff]
          %v664 = vld [vmem:[#allocation2 + $0x110] sm:$0xff]
          %v665 = vld [vmem:[#allocation2 + $0x118] sm:$0xff]
          %v666 = vld [vmem:[#allocation2 + $0x120] sm:$0xff]
          %v667 = vld [vmem:[#allocation2 + $0x128] sm:$0xff]
          %v668 = vld [vmem:[#allocation2 + $0x130] sm:$0xff]
          %v669 = vld [vmem:[#allocation2 + $0x138] sm:$0xff]
          %v670 = vld [vmem:[#allocation2 + $0x140] sm:$0xff]
          %v671 = vld [vmem:[#allocation2 + $0x148] sm:$0xff]
          %v672 = vld [vmem:[#allocation2 + $0x150] sm:$0xff]
          %v673 = vld [vmem:[#allocation2 + $0x158] sm:$0xff]
          %v674 = vld [vmem:[#allocation2 + $0x160] sm:$0xff]
          %v675 = vld [vmem:[#allocation2 + $0x168] sm:$0xff]
          %v676 = vld [vmem:[#allocation2 + $0x170] sm:$0xff]
          %v677 = vld [vmem:[#allocation2 + $0x178] sm:$0xff]
          %v678 = vld [vmem:[#allocation2 + $0x180] sm:$0xff]
          %v679 = vld [vmem:[#allocation2 + $0x188] sm:$0xff]
          %v680 = vld [vmem:[#allocation2 + $0x190] sm:$0xff]
          %v681 = vld [vmem:[#allocation2 + $0x198] sm:$0xff]
          %v682 = vld [vmem:[#allocation2 + $0x1a0] sm:$0xff]
          %v683 = vld [vmem:[#allocation2 + $0x1a8] sm:$0xff]
          %v684 = vld [vmem:[#allocation2 + $0x1b0] sm:$0xff]
          %v685 = vld [vmem:[#allocation2 + $0x1b8] sm:$0xff]
          %v686 = vld [vmem:[#allocation2 + $0x1c0] sm:$0xff]
          %v687 = vld [vmem:[#allocation2 + $0x1c8] sm:$0xff]
          %v688 = vld [vmem:[#allocation2 + $0x1d0] sm:$0xff]
          %v689 = vld [vmem:[#allocation2 + $0x1d8] sm:$0xff]
          %v690 = vld [vmem:[#allocation2 + $0x1e0] sm:$0xff]
          %v691 = vld [vmem:[#allocation2 + $0x1e8] sm:$0xff]
          %v692 = vld [vmem:[#allocation2 + $0x1f0] sm:$0xff]
          %v693 = vld [vmem:[#allocation2 + $0x1f8] sm:$0xff]
          %694 = vst.msk [vmem:[%s172] sm:$0xff] %vm562, %v630
          %695 = vst.msk [vmem:[%s172 + $0x8] sm:$0xff] %vm562, %v631
          %696 = vst.msk [vmem:[%s172 + $0x10] sm:$0xff] %vm562, %v632
          %697 = vst.msk [vmem:[%s172 + $0x18] sm:$0xff] %vm562, %v633
          %698 = vst.msk [vmem:[%s172 + $0x20] sm:$0xff] %vm562, %v634
          %699 = vst.msk [vmem:[%s172 + $0x28] sm:$0xff] %vm562, %v635
          %700 = vst.msk [vmem:[%s172 + $0x30] sm:$0xff] %vm562, %v636
          %701 = vst.msk [vmem:[%s172 + $0x38] sm:$0xff] %vm562, %v637
          %702 = vst.msk [vmem:[%s172 + $0x40] sm:$0xff] %vm562, %v638
          %703 = vst.msk [vmem:[%s172 + $0x48] sm:$0xff] %vm562, %v639
          %704 = vst.msk [vmem:[%s172 + $0x50] sm:$0xff] %vm562, %v640
          %705 = vst.msk [vmem:[%s172 + $0x58] sm:$0xff] %vm562, %v641
          %706 = vst.msk [vmem:[%s172 + $0x60] sm:$0xff] %vm562, %v642
          %707 = vst.msk [vmem:[%s172 + $0x68] sm:$0xff] %vm562, %v643
          %708 = vst.msk [vmem:[%s172 + $0x70] sm:$0xff] %vm562, %v644
          %709 = vst.msk [vmem:[%s172 + $0x78] sm:$0xff] %vm562, %v645
          %710 = vst.msk [vmem:[%s172 + $0x80] sm:$0xff] %vm562, %v646
          %711 = vst.msk [vmem:[%s172 + $0x88] sm:$0xff] %vm562, %v647
          %712 = vst.msk [vmem:[%s172 + $0x90] sm:$0xff] %vm562, %v648
          %713 = vst.msk [vmem:[%s172 + $0x98] sm:$0xff] %vm562, %v649
          %714 = vst.msk [vmem:[%s172 + $0xa0] sm:$0xff] %vm562, %v650
          %715 = vst.msk [vmem:[%s172 + $0xa8] sm:$0xff] %vm562, %v651
          %716 = vst.msk [vmem:[%s172 + $0xb0] sm:$0xff] %vm562, %v652
          %717 = vst.msk [vmem:[%s172 + $0xb8] sm:$0xff] %vm562, %v653
          %718 = vst.msk [vmem:[%s172 + $0xc0] sm:$0xff] %vm562, %v654
          %719 = vst.msk [vmem:[%s172 + $0xc8] sm:$0xff] %vm562, %v655
          %720 = vst.msk [vmem:[%s172 + $0xd0] sm:$0xff] %vm562, %v656
          %721 = vst.msk [vmem:[%s172 + $0xd8] sm:$0xff] %vm562, %v657
          %722 = vst.msk [vmem:[%s172 + $0xe0] sm:$0xff] %vm562, %v658
          %723 = vst.msk [vmem:[%s172 + $0xe8] sm:$0xff] %vm562, %v659
          %724 = vst.msk [vmem:[%s172 + $0xf0] sm:$0xff] %vm562, %v660
          %725 = vst.msk [vmem:[%s172 + $0xf8] sm:$0xff] %vm562, %v661
          %726 = vst.msk [vmem:[%s172 + $0x100] sm:$0xff] %vm562, %v662
          %727 = vst.msk [vmem:[%s172 + $0x108] sm:$0xff] %vm562, %v663
          %728 = vst.msk [vmem:[%s172 + $0x110] sm:$0xff] %vm562, %v664
          %729 = vst.msk [vmem:[%s172 + $0x118] sm:$0xff] %vm562, %v665
          %730 = vst.msk [vmem:[%s172 + $0x120] sm:$0xff] %vm562, %v666
          %731 = vst.msk [vmem:[%s172 + $0x128] sm:$0xff] %vm562, %v667
          %732 = vst.msk [vmem:[%s172 + $0x130] sm:$0xff] %vm562, %v668
          %733 = vst.msk [vmem:[%s172 + $0x138] sm:$0xff] %vm562, %v669
          %734 = vst.msk [vmem:[%s172 + $0x140] sm:$0xff] %vm562, %v670
          %735 = vst.msk [vmem:[%s172 + $0x148] sm:$0xff] %vm562, %v671
          %736 = vst.msk [vmem:[%s172 + $0x150] sm:$0xff] %vm562, %v672
          %737 = vst.msk [vmem:[%s172 + $0x158] sm:$0xff] %vm562, %v673
          %738 = vst.msk [vmem:[%s172 + $0x160] sm:$0xff] %vm562, %v674
          %739 = vst.msk [vmem:[%s172 + $0x168] sm:$0xff] %vm562, %v675
          %740 = vst.msk [vmem:[%s172 + $0x170] sm:$0xff] %vm562, %v676
          %741 = vst.msk [vmem:[%s172 + $0x178] sm:$0xff] %vm562, %v677
          %742 = vst.msk [vmem:[%s172 + $0x180] sm:$0xff] %vm562, %v678
          %743 = vst.msk [vmem:[%s172 + $0x188] sm:$0xff] %vm562, %v679
          %744 = vst.msk [vmem:[%s172 + $0x190] sm:$0xff] %vm562, %v680
          %745 = vst.msk [vmem:[%s172 + $0x198] sm:$0xff] %vm562, %v681
          %746 = vst.msk [vmem:[%s172 + $0x1a0] sm:$0xff] %vm562, %v682
          %747 = vst.msk [vmem:[%s172 + $0x1a8] sm:$0xff] %vm562, %v683
          %748 = vst.msk [vmem:[%s172 + $0x1b0] sm:$0xff] %vm562, %v684
          %749 = vst.msk [vmem:[%s172 + $0x1b8] sm:$0xff] %vm562, %v685
          %750 = vst.msk [vmem:[%s172 + $0x1c0] sm:$0xff] %vm562, %v686
          %751 = vst.msk [vmem:[%s172 + $0x1c8] sm:$0xff] %vm562, %v687
          %752 = vst.msk [vmem:[%s172 + $0x1d0] sm:$0xff] %vm562, %v688
          %753 = vst.msk [vmem:[%s172 + $0x1d8] sm:$0xff] %vm562, %v689
          %754 = vst.msk [vmem:[%s172 + $0x1e0] sm:$0xff] %vm562, %v690
          %755 = vst.msk [vmem:[%s172 + $0x1e8] sm:$0xff] %vm562, %v691
          %756 = vst.msk [vmem:[%s172 + $0x1f0] sm:$0xff] %vm562, %v692
          %757 = vst.msk [vmem:[%s172 + $0x1f8] sm:$0xff] %vm562, %v693
        $region36: #{tpu_custom_call.1} parent=23 // pred_fallthru
          _
        %p758 = scmp.lt.s32.totalorder %s20, 1
        %s759 = scalar_select %p758, %s20, 1
        %p760 = scmp.lt.s32.totalorder %s21, 0
        %s761 = scalar_select %p760, %s21, 0
        %s762 = smul.addr %s761, 64
        %s763 = smul.addr %s759, 64
        %s764 = sadd.s32 %s762, %s763
        %s765 = smul.addr %s764, 8
        %s766 = scalar_lea.vmem %s1, %s765
        // Predicated region
        $region37: #{tpu_custom_call.1} parent=23 // pred_check
          %p767 = pneg %p84
        $region38: #{tpu_custom_call.1} parent=23 // pred_check_branch
          %769 = sbr.rel (%p767) target = $region40
        $region39: #{tpu_custom_call.1} parent=23 // pred_region
          _
        $region40: #{tpu_custom_call.1} parent=23 // pred_fallthru
          _
      $region24: #{tpu_custom_call.1} parent=5 // pred_fallthru
        _
      %p770 = scmp.le.s32.totalorder 2, %s10
      // Predicated region
      $region41: #{tpu_custom_call.1} parent=5 // pred_check
        %p771 = pneg %p770
      $region42: #{tpu_custom_call.1} parent=5 // pred_check_branch
        %773 = sbr.rel (%p771) target = $region44
      $region43: #{tpu_custom_call.1} parent=5 // pred_region
        %s774 = ssub.s32 %s10, 2
        // Predicated region
        $region45: #{tpu_custom_call.1} parent=43 // pred_check
          %p775 = pneg %p90
        $region46: #{tpu_custom_call.1} parent=43 // pred_check_branch
          %777 = sbr.rel (%p775) target = $region48
        $region47: #{tpu_custom_call.1} parent=43 // pred_region
          %p778 = scmp.lt.s32.totalorder %s23, 1
          %s779 = scalar_select %p778, %s23, 1
          %p780 = scmp.lt.s32.totalorder %s24, 0
          %s781 = scalar_select %p780, %s24, 0
          %s782 = smul.addr %s781, 64
          %s783 = smul.addr %s779, 64
          %s784 = sadd.s32 %s782, %s783
          %s785 = smul.addr %s784, 8
          %s786 = scalar_lea.vmem %s1, %s785
        $region48: #{tpu_custom_call.1} parent=43 // pred_fallthru
          _
      $region44: #{tpu_custom_call.1} parent=5 // pred_fallthru
        _
    $region6: #{tpu_custom_call.1} parent=1 // loop_footer
      %s14 = sadd.s32 1, %s10
    $region7: #{tpu_custom_call.1} parent=1 // loop_footer_branch
      %9 = sbr.rel target = $region3
    $region8: #{tpu_custom_call.1} parent=1 // loop_exit
      _
    %787 = vsyncpa [#allocation4], 1
    %s788 = scalar_lea.sflag [#allocation4], 1
    %789 = vsyncpa %s788, 1

</llo_original>
